<compile_context>
chip_gen: v5e
topology: v5e:2x2
jax: 0.10.0
libtpu: 0.0.40
codegen_flags: <defaults>
</compile_context>

<pallas_src>
import functools

import jax
import jax.numpy as jnp
import numpy as np
from jax import lax
from jax.experimental import pallas as pl
from jax.experimental.pallas import tpu as pltpu

PRED_HORIZONS = (6, 24, 96)
N_PRED = sum(PRED_HORIZONS)        # 126
N_CONF = len(PRED_HORIZONS)        # 3
CONF_OFF = 128                     # lane-aligned start of confidence block in the slab
N_PAD = 256                        # lane-dense output slab width

_PRED_OFFS = []
_o = 0
for _h in PRED_HORIZONS:
    _PRED_OFFS.append(_o)
    _o += _h
_PRED_OFFS = tuple(_PRED_OFFS)     # (0, 6, 30)

MAX_TILE_B = 256                   # MXU-row-matched batch tile (v6e/v7x; fine on v5e)
_FOLD_X_BYTES = 2 * 1024 * 1024    # max bytes of a folded (TILE_B, S, D) activation block


def _round_up(x, m):
    return ((x + m - 1) // m) * m


def _hierarchical_predictor_kernel(total_b, x_ref, w1_ref, w2_ref, b_ref, cw_ref,
                                   out_ref, loss_ref):
    """Fused HierarchicalPredictor forward for one batch tile.

    x_ref   : [TILE_B, S, D] (folded) or [TILE_B, D]  activations (VMEM)
    w1_ref  : [D, H_PAD]   packed first-layer weights (zero pad)
    w2_ref  : [H_PAD, 256] block-diagonal second-layer weights (zero pad)
    b_ref   : [2, >=256]   row 0 = packed first-layer bias, row 1 = second-layer bias
    cw_ref  : [1, 1]       consistency weight (SMEM scalar)
    out_ref : [TILE_B, 256] lane-dense slab: [0:126) p6|p24|p96, [128:131) conf, rest 0
    loss_ref: [8, 128]     per-tile partial consistency loss at [0, 0], rest 0
    """
    if len(x_ref.shape) == 3:
        # Folded last-timestep selection: read only row S-1 of the tile.
        x = x_ref[:, x_ref.shape[1] - 1, :]
    else:
        x = x_ref[...]
    x = x.astype(jnp.float32)

    h_pad = w1_ref.shape[1]
    n_pad = w2_ref.shape[1]
    b1 = b_ref[0:1, :h_pad]                                   # [1, H_PAD]
    b2 = b_ref[1:2, :n_pad]                                   # [1, 256]

    # Fused first layer (3 horizon MLPs + confidence MLP) -> one MXU push.
    h = jnp.dot(x, w1_ref[...], preferred_element_type=jnp.float32) + b1
    h = jnp.maximum(h, 0.0)            # ReLU; Dropout is identity in eval mode

    # Fused block-diagonal second layer: predictions + confidence logits.
    y = jnp.dot(h, w2_ref[...], preferred_element_type=jnp.float32) + b2   # [TB, 256]

    tb = y.shape[0]

    # --- confidence softmax spliced in-register (single unmasked store) ----------
    col = lax.broadcasted_iota(jnp.int32, (tb, n_pad), 1)
    is_conf = (col >= CONF_OFF) & (col < CONF_OFF + N_CONF)
    logits = jnp.where(is_conf, y, -1e30)                     # mask non-conf lanes
    m = jnp.max(logits, axis=-1, keepdims=True)
    e = jnp.where(is_conf, jnp.exp(logits - m), 0.0)
    denom = jnp.sum(e, axis=-1, keepdims=True)
    conf_full = e * pl.reciprocal(denom, approx=False)        # exact: keep 1e-5 tol
    out_ref[...] = jnp.where(is_conf, conf_full, y).astype(out_ref.dtype)

    # --- partial consistency loss (batch-global mean handled via wrapper sum) ----
    p6 = y[:, _PRED_OFFS[0]:_PRED_OFFS[0] + PRED_HORIZONS[0]]
    p24 = y[:, _PRED_OFFS[1]:_PRED_OFFS[1] + PRED_HORIZONS[1]]
    p96 = y[:, _PRED_OFFS[2]:_PRED_OFFS[2] + PRED_HORIZONS[2]]

    row = lax.broadcasted_iota(jnp.int32, (tb, 1), 0) + pl.program_id(0) * tb
    valid = row < total_b                                     # mask padded tail rows
    d1 = jnp.sum(jnp.where(valid, (p6 - p24[:, :PRED_HORIZONS[0]]) ** 2, 0.0))
    d2 = jnp.sum(jnp.where(valid, (p24 - p96[:, :PRED_HORIZONS[1]]) ** 2, 0.0))
    part = (d1 / (total_b * PRED_HORIZONS[0])
            + d2 / (total_b * PRED_HORIZONS[1])) * cw_ref[0, 0]

    r = lax.broadcasted_iota(jnp.int32, (8, 128), 0)
    c = lax.broadcasted_iota(jnp.int32, (8, 128), 1)
    loss_ref[...] = jnp.where((r == 0) & (c == 0), part, 0.0)


def pack_params(params, d_model):
    """Pack the 16 tiny linear tensors into 3 lane-aligned slabs (+1 SMEM scalar).

    Done once at parameter-prep time, NOT per call.
    Hidden layout : [h6 | h24 | h96 | conf | zero-pad]          -> width H_PAD (>=128)
    Output layout : [p6 | p24 | p96 | 0,0 | conf logits | 0...] -> width 256,
                    confidence logits lane-aligned at column 128.
    """
    hh = d_model // 2
    hc = d_model // 4
    h_total = len(PRED_HORIZONS) * hh + hc
    h_pad = _round_up(max(h_total, 128), 128)
    b_width = max(h_pad, N_PAD)

    w1 = np.zeros((d_model, h_pad), np.float32)
    b1 = np.zeros((h_pad,), np.float32)
    w2 = np.zeros((h_pad, N_PAD), np.float32)
    b2 = np.zeros((N_PAD,), np.float32)

    h_off = 0
    for i, h in enumerate(PRED_HORIZONS):
        p = params[f'horizon_{h}']
        n_off = _PRED_OFFS[i]
        w1[:, h_off:h_off + hh] = np.asarray(p['w1'])
        b1[h_off:h_off + hh] = np.asarray(p['b1'])[0]
        w2[h_off:h_off + hh, n_off:n_off + h] = np.asarray(p['w2'])
        b2[n_off:n_off + h] = np.asarray(p['b2'])[0]
        h_off += hh
    c = params['confidence']
    w1[:, h_off:h_off + hc] = np.asarray(c['w1'])
    b1[h_off:h_off + hc] = np.asarray(c['b1'])[0]
    w2[h_off:h_off + hc, CONF_OFF:CONF_OFF + N_CONF] = np.asarray(c['w2'])
    b2[CONF_OFF:CONF_OFF + N_CONF] = np.asarray(c['b2'])[0]

    b_all = np.zeros((2, b_width), np.float32)
    b_all[0, :h_pad] = b1
    b_all[1, :N_PAD] = b2

    return {
        'w1': jnp.asarray(w1),
        'w2': jnp.asarray(w2),
        'b': jnp.asarray(b_all),
        'cw': jnp.asarray(params['consistency_weight'], jnp.float32).reshape(1, 1),
    }


def hierarchical_predictor(x, packed):
    """x: [B, S, D] float32; packed = pack_params(...). Matches the PyTorch forward."""
    B, S, D = x.shape
    tile_b = min(B, MAX_TILE_B)            # ==B (full) or 256 (multiple of 8): always legal
    grid = (pl.cdiv(B, tile_b),)

    # Fold the last-timestep selection into the kernel when the (TILE_B, S, D) block
    # is small; otherwise fall back to a wrapper slice (keeps DMA bytes / VMEM bounded).
    fold = tile_b * S * D * 4 <= _FOLD_X_BYTES
    if fold:
        x_op = x
        x_spec = pl.BlockSpec((tile_b, S, D), lambda i: (i, 0, 0))
    else:
        x_op = x[:, -1, :]
        x_spec = pl.BlockSpec((tile_b, D), lambda i: (i, 0))

    h_pad = packed['w1'].shape[1]
    b_w = packed['b'].shape[1]

    out, loss_parts = pl.pallas_call(
        functools.partial(_hierarchical_predictor_kernel, B),
        out_shape=(
            jax.ShapeDtypeStruct((B, N_PAD), jnp.float32),
            jax.ShapeDtypeStruct((grid[0], 8, 128), jnp.float32),
        ),
        grid=grid,
        in_specs=[
            x_spec,
            pl.BlockSpec((D, h_pad), lambda i: (0, 0)),      # VMEM-resident weight slabs
            pl.BlockSpec((h_pad, N_PAD), lambda i: (0, 0)),
            pl.BlockSpec((2, b_w), lambda i: (0, 0)),
            pl.BlockSpec(memory_space=pltpu.MemorySpace.SMEM),
        ],
        out_specs=(
            pl.BlockSpec((tile_b, N_PAD), lambda i: (i, 0)),
            pl.BlockSpec((None, 8, 128), lambda i: (i, 0, 0)),
        ),
        compiler_params=pltpu.CompilerParams(
            dimension_semantics=("parallel",)),
    )(x_op, packed['w1'], packed['w2'], packed['b'], packed['cw'])

    preds = {}
    for h, off in zip(PRED_HORIZONS, _PRED_OFFS):
        preds[f'horizon_{h}'] = out[:, off:off + h]
    conf = out[:, CONF_OFF:CONF_OFF + N_CONF]     # lane-aligned slice
    loss = jnp.sum(loss_parts)                    # finish the batch-global mean

    return {
        'predictions': preds,
        'confidence_weights': conf,
        'consistency_loss': loss,
    }


def _linear_params(key, fan_in, fan_out):
    """PyTorch-style nn.Linear init: U(-1/sqrt(fan_in), 1/sqrt(fan_in))."""
    kw, kb = jax.random.split(key)
    bound = 1.0 / np.sqrt(fan_in)
    w = jax.random.uniform(kw, (fan_in, fan_out), jnp.float32, -bound, bound)
    b = jax.random.uniform(kb, (1, fan_out), jnp.float32, -bound, bound)
    return w, b


def init_params(key, d_model):
    params = {}
    keys = jax.random.split(key, 2 * len(PRED_HORIZONS) + 2)
    ki = 0
    for h in PRED_HORIZONS:
        w1, b1 = _linear_params(keys[ki], d_model, d_model // 2); ki += 1
        w2, b2 = _linear_params(keys[ki], d_model // 2, h); ki += 1
        params[f'horizon_{h}'] = {'w1': w1, 'b1': b1, 'w2': w2, 'b2': b2}
    wc1, bc1 = _linear_params(keys[ki], d_model, d_model // 4); ki += 1
    wc2, bc2 = _linear_params(keys[ki], d_model // 4, len(PRED_HORIZONS)); ki += 1
    params['confidence'] = {'w1': wc1, 'b1': bc1, 'w2': wc2, 'b2': bc2}
    params['consistency_weight'] = jnp.full((1, 1), 0.1, jnp.float32)
    return params


def reference_forward(x, params):
    """Pure-JAX reference for correctness checking (uses the unpacked params)."""
    last = x[:, -1, :]

    def mlp(p):
        h = jnp.maximum(last @ p['w1'] + p['b1'], 0.0)
        return h @ p['w2'] + p['b2']

    preds = [mlp(params[f'horizon_{h}']) for h in PRED_HORIZONS]
    c = params['confidence']
    hc = jnp.maximum(last @ c['w1'] + c['b1'], 0.0)
    conf = jax.nn.softmax(hc @ c['w2'] + c['b2'], axis=-1)
    loss = 0.0
    for i in range(len(preds) - 1):
        ov = min(preds[i].shape[1], preds[i + 1].shape[1])
        loss += jnp.mean((preds[i][:, :ov] - preds[i + 1][:, :ov]) ** 2)
    loss = loss * params['consistency_weight'][0, 0]
    return preds, conf, loss


if __name__ == "__main__":
    B, S, D = 2, 8, 32
    key = jax.random.PRNGKey(0)
    kx, kp = jax.random.split(key)
    x = jax.random.normal(kx, (B, S, D), jnp.float32)
    params = init_params(kp, D)
    packed = pack_params(params, D)   # one-time packing, reused across calls

    out = hierarchical_predictor(x, packed)
    jax.block_until_ready(out)

    # Sanity check against the pure-JAX reference.
    ref_preds, ref_conf, ref_loss = reference_forward(x, params)
    for h, rp in zip(PRED_HORIZONS, ref_preds):
        np.testing.assert_allclose(
            np.asarray(out['predictions'][f'horizon_{h}']), np.asarray(rp),
            rtol=1e-5, atol=1e-5)
    np.testing.assert_allclose(np.asarray(out['confidence_weights']),
                               np.asarray(ref_conf), rtol=1e-5, atol=1e-5)
    np.testing.assert_allclose(np.asarray(out['consistency_loss']),
                               np.asarray(ref_loss), rtol=1e-5, atol=1e-5)

    print("KERNEL_OK")
</pallas_src>

<mosaic_0001>
module attributes {stable_mosaic.version = 11 : i64} {
  func.func @_hierarchical_predictor_kernel(%arg0: i32, %arg1: memref<2x8x32xf32, #tpu.memory_space<vmem>>, %arg2: memref<32x128xf32, #tpu.memory_space<vmem>>, %arg3: memref<128x256xf32, #tpu.memory_space<vmem>>, %arg4: memref<2x256xf32, #tpu.memory_space<vmem>>, %arg5: memref<1x1xf32, #tpu.memory_space<smem>>, %arg6: memref<2x256xf32, #tpu.memory_space<vmem>>, %arg7: memref<1x8x128xf32, #tpu.memory_space<vmem>>) attributes {dimension_semantics = [#tpu.dimension_semantics<parallel>], iteration_bounds = array<i64: 1>, scalar_prefetch = 0 : i64, scratch_operands = 0 : i64, tpu.core_type = #tpu.core_type<tc>, window_params = [{transform_indices = @transform_0, window_bounds = array<i64: 2, 8, 32>}, {pipeline_mode = #tpu.pipeline_mode<synchronous>, transform_indices = @transform_1, window_bounds = array<i64: 32, 128>}, {pipeline_mode = #tpu.pipeline_mode<synchronous>, transform_indices = @transform_2, window_bounds = array<i64: 128, 256>}, {pipeline_mode = #tpu.pipeline_mode<synchronous>, transform_indices = @transform_3, window_bounds = array<i64: 2, 256>}, {transform_indices = @transform_4, window_bounds = array<i64: 1, 1>}, {transform_indices = @transform_5, window_bounds = array<i64: 2, 256>}, {transform_indices = @transform_6, window_bounds = array<i64: 1, 8, 128>}]} {
    %c0 = arith.constant 0 : index
    %c7 = arith.constant 7 : index
    %c0_0 = arith.constant 0 : index
    %0 = vector.load %arg1[%c0, %c7, %c0_0] : memref<2x8x32xf32, #tpu.memory_space<vmem>>, vector<2x1x32xf32>
    %1 = vector.shape_cast %0 : vector<2x1x32xf32> to vector<2x32xf32>
    %c0_1 = arith.constant 0 : index
    %c0_2 = arith.constant 0 : index
    %2 = vector.load %arg4[%c0_1, %c0_2] : memref<2x256xf32, #tpu.memory_space<vmem>>, vector<1x128xf32>
    %c1 = arith.constant 1 : index
    %c0_3 = arith.constant 0 : index
    %3 = vector.load %arg4[%c1, %c0_3] : memref<2x256xf32, #tpu.memory_space<vmem>>, vector<1x256xf32>
    %c0_4 = arith.constant 0 : index
    %c0_5 = arith.constant 0 : index
    %4 = vector.load %arg2[%c0_4, %c0_5] : memref<32x128xf32, #tpu.memory_space<vmem>>, vector<32x128xf32>
    %cst = arith.constant dense<0.000000e+00> : vector<2x128xf32>
    %5 = tpu.matmul %1, %4, %cst {dimension_numbers = #tpu.dot_dimension_numbers<[1], [0], [0], [1], [0, 0, 1, 1], [], []>} : vector<2x32xf32>, vector<32x128xf32>, vector<2x128xf32> -> vector<2x128xf32>
    %6 = vector.broadcast %2 : vector<1x128xf32> to vector<2x128xf32>
    %7 = arith.addf %5, %6 : vector<2x128xf32>
    %cst_6 = arith.constant 0.000000e+00 : f32
    %8 = vector.broadcast %cst_6 : f32 to vector<2x128xf32>
    %9 = arith.maximumf %7, %8 : vector<2x128xf32>
    %c0_7 = arith.constant 0 : index
    %c0_8 = arith.constant 0 : index
    %10 = vector.load %arg3[%c0_7, %c0_8] : memref<128x256xf32, #tpu.memory_space<vmem>>, vector<128x256xf32>
    %cst_9 = arith.constant dense<0.000000e+00> : vector<2x256xf32>
    %11 = tpu.matmul %9, %10, %cst_9 {dimension_numbers = #tpu.dot_dimension_numbers<[1], [0], [0], [1], [0, 0, 1, 1], [], []>} : vector<2x128xf32>, vector<128x256xf32>, vector<2x256xf32> -> vector<2x256xf32>
    %12 = vector.broadcast %3 : vector<1x256xf32> to vector<2x256xf32>
    %13 = arith.addf %11, %12 : vector<2x256xf32>
    %14 = tpu.iota {dimensions = array<i32: 1>} : vector<2x256xi32>
    %c128_i32 = arith.constant 128 : i32
    %15 = vector.broadcast %c128_i32 : i32 to vector<2x256xi32>
    %16 = arith.cmpi sge, %14, %15 : vector<2x256xi32>
    %c131_i32 = arith.constant 131 : i32
    %17 = vector.broadcast %c131_i32 : i32 to vector<2x256xi32>
    %18 = arith.cmpi slt, %14, %17 : vector<2x256xi32>
    %19 = arith.andi %16, %18 : vector<2x256xi1>
    %cst_10 = arith.constant -1.000000e+30 : f32
    %20 = vector.broadcast %cst_10 : f32 to vector<2x256xf32>
    %21 = arith.select %19, %13, %20 : vector<2x256xi1>, vector<2x256xf32>
    %cst_11 = arith.constant dense<0xFF800000> : vector<2xf32>
    %22 = vector.multi_reduction <maximumf>, %21, %cst_11 [1] : vector<2x256xf32> to vector<2xf32>
    %23 = vector.shape_cast %22 : vector<2xf32> to vector<2x1xf32>
    %24 = vector.broadcast %23 : vector<2x1xf32> to vector<2x256xf32>
    %25 = arith.subf %21, %24 : vector<2x256xf32>
    %26 = math.exp %25 : vector<2x256xf32>
    %cst_12 = arith.constant 0.000000e+00 : f32
    %27 = vector.broadcast %cst_12 : f32 to vector<2x256xf32>
    %28 = arith.select %19, %26, %27 : vector<2x256xi1>, vector<2x256xf32>
    %cst_13 = arith.constant dense<0.000000e+00> : vector<2xf32>
    %29 = vector.multi_reduction <add>, %28, %cst_13 [1] : vector<2x256xf32> to vector<2xf32>
    %30 = vector.shape_cast %29 : vector<2xf32> to vector<2x1xf32>
    %31 = tpu.reciprocal %30 : vector<2x1xf32> -> vector<2x1xf32>
    %32 = vector.broadcast %31 : vector<2x1xf32> to vector<2x256xf32>
    %33 = arith.mulf %28, %32 : vector<2x256xf32>
    %34 = arith.select %19, %33, %13 : vector<2x256xi1>, vector<2x256xf32>
    %c0_14 = arith.constant 0 : index
    %c0_15 = arith.constant 0 : index
    %35 = vector.load %arg6[%c0_14, %c0_15] : memref<2x256xf32, #tpu.memory_space<vmem>>, vector<2x256xf32>
    tpu.vector_store %arg6[%c0_14, %c0_15], %34 {strides = array<i32>} : memref<2x256xf32, #tpu.memory_space<vmem>>, vector<2x256xf32>,
    %36 = vector.extract_strided_slice %13 {offsets = [0, 0], sizes = [2, 6], strides = [1, 1]} : vector<2x256xf32> to vector<2x6xf32>
    %37 = vector.extract_strided_slice %13 {offsets = [0, 6], sizes = [2, 24], strides = [1, 1]} : vector<2x256xf32> to vector<2x24xf32>
    %38 = vector.extract_strided_slice %13 {offsets = [0, 30], sizes = [2, 96], strides = [1, 1]} : vector<2x256xf32> to vector<2x96xf32>
    %39 = tpu.iota {dimensions = array<i32: 0>} : vector<2x1xi32>
    %c2_i32 = arith.constant 2 : i32
    %40 = arith.muli %arg0, %c2_i32 : i32
    %41 = vector.broadcast %40 : i32 to vector<2x1xi32>
    %42 = arith.addi %39, %41 : vector<2x1xi32>
    %c2_i32_16 = arith.constant 2 : i32
    %43 = vector.broadcast %c2_i32_16 : i32 to vector<2x1xi32>
    %44 = arith.cmpi slt, %42, %43 : vector<2x1xi32>
    %45 = vector.extract_strided_slice %37 {offsets = [0, 0], sizes = [2, 6], strides = [1, 1]} : vector<2x24xf32> to vector<2x6xf32>
    %46 = arith.subf %36, %45 : vector<2x6xf32>
    %47 = arith.mulf %46, %46 : vector<2x6xf32>
    %cst_17 = arith.constant 0.000000e+00 : f32
    %48 = vector.shape_cast %44 : vector<2x1xi1> to vector<2x1xi1>
    %49 = vector.broadcast %48 : vector<2x1xi1> to vector<2x6xi1>
    %50 = vector.broadcast %cst_17 : f32 to vector<2x6xf32>
    %51 = arith.select %49, %47, %50 : vector<2x6xi1>, vector<2x6xf32>
    %52 = vector.shape_cast %51 : vector<2x6xf32> to vector<1x2x6xf32>
    %cst_18 = arith.constant dense<0.000000e+00> : vector<1xf32>
    %53 = vector.multi_reduction <add>, %52, %cst_18 [1, 2] : vector<1x2x6xf32> to vector<1xf32>
    %54 = vector.shape_cast %53 : vector<1xf32> to vector<1x1x1xf32>
    %55 = vector.extract %54[0, 0, 0] : f32 from vector<1x1x1xf32>
    %56 = vector.extract_strided_slice %38 {offsets = [0, 0], sizes = [2, 24], strides = [1, 1]} : vector<2x96xf32> to vector<2x24xf32>
    %57 = arith.subf %37, %56 : vector<2x24xf32>
    %58 = arith.mulf %57, %57 : vector<2x24xf32>
    %cst_19 = arith.constant 0.000000e+00 : f32
    %59 = vector.shape_cast %44 : vector<2x1xi1> to vector<2x1xi1>
    %60 = vector.broadcast %59 : vector<2x1xi1> to vector<2x24xi1>
    %61 = vector.broadcast %cst_19 : f32 to vector<2x24xf32>
    %62 = arith.select %60, %58, %61 : vector<2x24xi1>, vector<2x24xf32>
    %63 = vector.shape_cast %62 : vector<2x24xf32> to vector<1x2x24xf32>
    %cst_20 = arith.constant dense<0.000000e+00> : vector<1xf32>
    %64 = vector.multi_reduction <add>, %63, %cst_20 [1, 2] : vector<1x2x24xf32> to vector<1xf32>
    %65 = vector.shape_cast %64 : vector<1xf32> to vector<1x1x1xf32>
    %66 = vector.extract %65[0, 0, 0] : f32 from vector<1x1x1xf32>
    %cst_21 = arith.constant 1.200000e+01 : f32
    %67 = arith.divf %55, %cst_21 : f32
    %cst_22 = arith.constant 4.800000e+01 : f32
    %68 = arith.divf %66, %cst_22 : f32
    %69 = arith.addf %67, %68 : f32
    %c0_23 = arith.constant 0 : index
    %c0_24 = arith.constant 0 : index
    %70 = memref.load %arg5[%c0_23, %c0_24] : memref<1x1xf32, #tpu.memory_space<smem>>
    %71 = arith.mulf %69, %70 : f32
    %72 = tpu.iota {dimensions = array<i32: 0>} : vector<8x128xi32>
    %73 = tpu.iota {dimensions = array<i32: 1>} : vector<8x128xi32>
    %c0_i32 = arith.constant 0 : i32
    %74 = vector.broadcast %c0_i32 : i32 to vector<8x128xi32>
    %75 = arith.cmpi eq, %72, %74 : vector<8x128xi32>
    %c0_i32_25 = arith.constant 0 : i32
    %76 = vector.broadcast %c0_i32_25 : i32 to vector<8x128xi32>
    %77 = arith.cmpi eq, %73, %76 : vector<8x128xi32>
    %78 = arith.andi %75, %77 : vector<8x128xi1>
    %cst_26 = arith.constant 0.000000e+00 : f32
    %79 = vector.broadcast %71 : f32 to vector<8x128xf32>
    %80 = vector.broadcast %cst_26 : f32 to vector<8x128xf32>
    %81 = arith.select %78, %79, %80 : vector<8x128xi1>, vector<8x128xf32>
    %c0_27 = arith.constant 0 : index
    %c0_28 = arith.constant 0 : index
    %c0_29 = arith.constant 0 : index
    %82 = vector.load %arg7[%c0_27, %c0_28, %c0_29] : memref<1x8x128xf32, #tpu.memory_space<vmem>>, vector<1x8x128xf32>
    %83 = vector.shape_cast %82 : vector<1x8x128xf32> to vector<8x128xf32>
    %84 = vector.shape_cast %81 : vector<8x128xf32> to vector<1x8x128xf32>
    tpu.vector_store %arg7[%c0_27, %c0_28, %c0_29], %84 {strides = array<i32>} : memref<1x8x128xf32, #tpu.memory_space<vmem>>, vector<1x8x128xf32>,
    return
  }
  func.func @transform_0(%arg0: i32) -> (i32, i32, i32) {
    %c0_i32 = arith.constant 0 : i32
    %c0_i32_0 = arith.constant 0 : i32
    %c0_i32_1 = arith.constant 0 : i32
    return %arg0, %c0_i32, %c0_i32_0 : i32, i32, i32
  }
  func.func @transform_1(%arg0: i32) -> (i32, i32) {
    %c0_i32 = arith.constant 0 : i32
    %c0_i32_0 = arith.constant 0 : i32
    %c0_i32_1 = arith.constant 0 : i32
    return %c0_i32, %c0_i32_0 : i32, i32
  }
  func.func @transform_2(%arg0: i32) -> (i32, i32) {
    %c0_i32 = arith.constant 0 : i32
    %c0_i32_0 = arith.constant 0 : i32
    %c0_i32_1 = arith.constant 0 : i32
    return %c0_i32, %c0_i32_0 : i32, i32
  }
  func.func @transform_3(%arg0: i32) -> (i32, i32) {
    %c0_i32 = arith.constant 0 : i32
    %c0_i32_0 = arith.constant 0 : i32
    %c0_i32_1 = arith.constant 0 : i32
    return %c0_i32, %c0_i32_0 : i32, i32
  }
  func.func @transform_4(%arg0: i32) -> (i32, i32) {
    %c0_i32 = arith.constant 0 : i32
    %c0_i32_0 = arith.constant 0 : i32
    %c0_i32_1 = arith.constant 0 : i32
    return %c0_i32, %c0_i32_0 : i32, i32
  }
  func.func @transform_5(%arg0: i32) -> (i32, i32) {
    %c0_i32 = arith.constant 0 : i32
    %c0_i32_0 = arith.constant 0 : i32
    return %arg0, %c0_i32 : i32, i32
  }
  func.func @transform_6(%arg0: i32) -> (i32, i32, i32) {
    %c0_i32 = arith.constant 0 : i32
    %c0_i32_0 = arith.constant 0 : i32
    %c0_i32_1 = arith.constant 0 : i32
    return %arg0, %c0_i32, %c0_i32_0 : i32, i32, i32
  }
}

</mosaic_0001>

<llo_original>
// kernel: tpu_custom_call.1
$region0: #{tpu_custom_call.1}
  #allocation0 [shape = 'u32[]', space=smem, size = 0x4, offset = 0x4, fixed_abs, tag = 'smem constant byte address 0x4 - core index']
  #allocation1 [shape = 'u32[72,128]{1,0:T(1,128)}', space=vmem, size = 0x9000, scoped, tag = 'internal scratch']
  #allocation2 [shape = 'f32[1,1]{1,0:T(1,128)S(6)}', space=smem, size = 0x200, scoped, tag = 'scoped memory for tpu_custom_call.1']
  %s0 = inlined_call_operand.hbm [shape: f32[2,8,32], index: 0, kind: input, shape index: {}]
  %s1 = inlined_call_operand.hbm [shape: f32[32,128], index: 1, kind: input, shape index: {}]
  %s2 = inlined_call_operand.hbm [shape: f32[128,256], index: 2, kind: input, shape index: {}]
  %s3 = inlined_call_operand.vmem [shape: f32[2,256], index: 3, kind: input, shape index: {}]
  %s4 = inlined_call_operand.<no memory space> [shape: f32[1,1], index: 4, kind: input, shape index: {}]
  %s5 = inlined_call_operand.hbm [shape: f32[2,256], index: 5, kind: output, shape index: {0}]
  %s6 = inlined_call_operand.hbm [shape: f32[1,8,128], index: 6, kind: output, shape index: {1}]
  %7 = xla_tuple %s5, %s6
  %s8 = sld [smem:[#allocation0]]
  $region50: #{tpu_custom_call.1} parent=0
    _
  %s10 = ssub.s32 1, %s8
  %s11 = scalar_select 0, %s10, %s8
  %12 = sst [smem:[#allocation2]] %s4
  $region1: #{tpu_custom_call.1} parent=0
    #allocation3 [shape = 'u8[8192]{0}', space=vmem, size = 0x2000, scoped, tag = 'input window, operand 0, single buffered']
    #allocation4 [shape = 's32[1]{0}', space=sflag, size = 0x4, scoped, tag = 'scoped memory for tpu_custom_call.1']
    #allocation5 [shape = 's32[1]{0}', space=sflag, size = 0x4, scoped, tag = 'scoped memory for tpu_custom_call.1']
    #allocation6 [shape = 'u8[16384]{0}', space=vmem, size = 0x4000, scoped, tag = 'input window, operand 1, single buffered']
    #allocation7 [shape = 's32[1]{0}', space=sflag, size = 0x4, scoped, tag = 'scoped memory for tpu_custom_call.1']
    #allocation8 [shape = 'u8[131072]{0}', space=vmem, size = 0x20000, scoped, tag = 'input window, operand 2, single buffered']
    #allocation9 [shape = 'u8[2048]{0}', space=vmem, size = 0x800, scoped, tag = 'output window, operand 0, single buffered']
    #allocation10 [shape = 'u8[4096]{0}', space=vmem, size = 0x1000, scoped, tag = 'output window, operand 1, single buffered']
    #allocation11 [shape = 's32[1]{0}', space=sflag, size = 0x4, scoped, tag = 'scoped memory for tpu_custom_call.1']
    %13 = vsyncpa [#allocation4], 0
    %14 = vsyncpa [#allocation7], 0
    %15 = vsyncpa [#allocation5], 0
    %16 = vsyncpa [#allocation11], 0
    // Predicated region
    $region2: #{tpu_custom_call.1} parent=1 // pred_check
      _
    $region3: #{tpu_custom_call.1} parent=1 // pred_check_branch
      %18 = sbr.rel (0) target = $region5
    $region4: #{tpu_custom_call.1} parent=1 // pred_region
      %20 = vsyncadd [#allocation4], 0
      %s21 = sshll.u32 %s0, 4
      %s22 = int_to_ptr.hbm [resolvable:$true] %s21
      %s23 = sshll.u32 [#allocation3], 4
      %s24 = int_to_ptr.vmem [resolvable:$true] %s23
      %29 = dma.hbm_to_vmem [thread:$0]  %s22, 256, %s24, [#allocation4], 128, 128, 8
    $region5: #{tpu_custom_call.1} parent=1 // pred_fallthru
      _
    // Predicated region
    $region6: #{tpu_custom_call.1} parent=1 // pred_check
      _
    $region7: #{tpu_custom_call.1} parent=1 // pred_check_branch
      %31 = sbr.rel (0) target = $region9
    $region8: #{tpu_custom_call.1} parent=1 // pred_region
      %33 = vsyncadd [#allocation7], 0
      %s34 = sshll.u32 %s1, 4
      %s35 = int_to_ptr.hbm [resolvable:$true] %s34
      %s36 = sshll.u32 [#allocation6], 4
      %s37 = int_to_ptr.vmem [resolvable:$true] %s36
      %42 = dma.hbm_to_vmem [thread:$0]  %s35, 512, %s37, [#allocation7], 128, 128, 8
    $region9: #{tpu_custom_call.1} parent=1 // pred_fallthru
      _
    // Predicated region
    $region10: #{tpu_custom_call.1} parent=1 // pred_check
      _
    $region11: #{tpu_custom_call.1} parent=1 // pred_check_branch
      %44 = sbr.rel (0) target = $region13
    $region12: #{tpu_custom_call.1} parent=1 // pred_region
      %46 = vsyncadd [#allocation7], 0
      %s47 = sshll.u32 %s2, 4
      %s48 = int_to_ptr.hbm [resolvable:$true] %s47
      %s49 = sshll.u32 [#allocation8], 4
      %s50 = int_to_ptr.vmem [resolvable:$true] %s49
      %55 = dma.hbm_to_vmem [thread:$0]  %s48, 4096, %s50, [#allocation7], 256, 256, 16
    $region13: #{tpu_custom_call.1} parent=1 // pred_fallthru
      _
    // Predicated region
    $region14: #{tpu_custom_call.1} parent=1 // pred_check
      _
    $region15: #{tpu_custom_call.1} parent=1 // pred_check_branch
      %57 = sbr.rel (0) target = $region17
    $region16: #{tpu_custom_call.1} parent=1 // pred_region
      _
    $region17: #{tpu_custom_call.1} parent=1 // pred_fallthru
      _
    // Predicated region
    $region18: #{tpu_custom_call.1} parent=1 // pred_check
      _
    $region19: #{tpu_custom_call.1} parent=1 // pred_check_branch
      %59 = sbr.rel (0) target = $region21
    $region20: #{tpu_custom_call.1} parent=1 // pred_region
      _
    $region21: #{tpu_custom_call.1} parent=1 // pred_fallthru
      _
    // Predicated region
    $region22: #{tpu_custom_call.1} parent=1 // pred_check
      _
    $region23: #{tpu_custom_call.1} parent=1 // pred_check_branch
      %61 = sbr.rel (0) target = $region25
    $region24: #{tpu_custom_call.1} parent=1 // pred_region
      %63 = dma.done [#allocation4], 256
    $region25: #{tpu_custom_call.1} parent=1 // pred_fallthru
      _
    // Predicated region
    $region26: #{tpu_custom_call.1} parent=1 // pred_check
      _
    $region27: #{tpu_custom_call.1} parent=1 // pred_check_branch
      %65 = sbr.rel (0) target = $region29
    $region28: #{tpu_custom_call.1} parent=1 // pred_region
      %67 = dma.done [#allocation7], 512
    $region29: #{tpu_custom_call.1} parent=1 // pred_fallthru
      _
    // Predicated region
    $region30: #{tpu_custom_call.1} parent=1 // pred_check
      _
    $region31: #{tpu_custom_call.1} parent=1 // pred_check_branch
      %69 = sbr.rel (0) target = $region33
    $region32: #{tpu_custom_call.1} parent=1 // pred_region
      %71 = dma.done [#allocation7], 4096
    $region33: #{tpu_custom_call.1} parent=1 // pred_fallthru
      _
    %v72 = vld [vmem:[#allocation3 + $0x7] sm:$0x1]
    %v73 = vld [vmem:[#allocation3 + $0xf] sm:$0x1]
    %v74 = vld [vmem:[%s3] sm:$0x1]
    %s75 = scalar_lea.vmem %s3, 1
    %v76 = vld [vmem:[%s75] ss:$2 sm:$0x3]
    %v77 = vld [vmem:[#allocation6] sm:$0xff]
    %v78 = vld [vmem:[#allocation6 + $0x8] sm:$0xff]
    %v79 = vld [vmem:[#allocation6 + $0x10] sm:$0xff]
    %v80 = vld [vmem:[#allocation6 + $0x18] sm:$0xff]
    %v81 = vperm.slane %v74, 0
    %v84 = vrot.slane %v73, 7
    %vm85 = vcmask 1041409
    %v86 = vsel %vm85, %v84, %v72
    %vm87 = vcmask 261120
    %v88 = vsel %vm87, %v86, 0
    %90 = vmatpush.msra.mxu0 0.0
    %91 = vmatpush.msra.mxu0 0.0
    %92 = vmatpush.msra.mxu0 0.0
    %93 = vmatpush.msra.mxu0 0.0
    %94 = vmatpush.msra.mxu0 0.0
    %95 = vmatpush.msra.mxu0 0.0
    %96 = vmatpush.msra.mxu0 0.0
    %97 = vmatpush.msra.mxu0 0.0
    %98 = vmatpush.msra.mxu0 0.0
    %99 = vmatpush.msra.mxu0 0.0
    %100 = vmatpush.msra.mxu0 0.0
    %101 = vmatpush.msra.mxu0 0.0
    %102 = vmatpush.msra.mxu0 %v80
    %103 = vmatpush.msra.mxu0 %v79
    %104 = vmatpush.msra.mxu0 %v78
    %105 = vmatpush.msra.mxu0 %v77
    %106 = vmatmul.f32.gmra.mxu0 %v88
    %v107 = vpop.f32.mrf.mxu0
    %v108 = vadd.f32 %v81, %v107
    %109 = vdwg.mxu0
    %v110 = vmax.f32 %v108, 0.0
    %v111 = vld [vmem:[#allocation8] sm:$0xff]
    %v112 = vld [vmem:[#allocation8 + $0x8] sm:$0xff]
    %v113 = vld [vmem:[#allocation8 + $0x10] sm:$0xff]
    %v114 = vld [vmem:[#allocation8 + $0x18] sm:$0xff]
    %v115 = vld [vmem:[#allocation8 + $0x20] sm:$0xff]
    %v116 = vld [vmem:[#allocation8 + $0x28] sm:$0xff]
    %v117 = vld [vmem:[#allocation8 + $0x30] sm:$0xff]
    %v118 = vld [vmem:[#allocation8 + $0x38] sm:$0xff]
    %v119 = vld [vmem:[#allocation8 + $0x40] sm:$0xff]
    %v120 = vld [vmem:[#allocation8 + $0x48] sm:$0xff]
    %v121 = vld [vmem:[#allocation8 + $0x50] sm:$0xff]
    %v122 = vld [vmem:[#allocation8 + $0x58] sm:$0xff]
    %v123 = vld [vmem:[#allocation8 + $0x60] sm:$0xff]
    %v124 = vld [vmem:[#allocation8 + $0x68] sm:$0xff]
    %v125 = vld [vmem:[#allocation8 + $0x70] sm:$0xff]
    %v126 = vld [vmem:[#allocation8 + $0x78] sm:$0xff]
    %v127 = vld [vmem:[#allocation8 + $0x80] sm:$0xff]
    %v128 = vld [vmem:[#allocation8 + $0x88] sm:$0xff]
    %v129 = vld [vmem:[#allocation8 + $0x90] sm:$0xff]
    %v130 = vld [vmem:[#allocation8 + $0x98] sm:$0xff]
    %v131 = vld [vmem:[#allocation8 + $0xa0] sm:$0xff]
    %v132 = vld [vmem:[#allocation8 + $0xa8] sm:$0xff]
    %v133 = vld [vmem:[#allocation8 + $0xb0] sm:$0xff]
    %v134 = vld [vmem:[#allocation8 + $0xb8] sm:$0xff]
    %v135 = vld [vmem:[#allocation8 + $0xc0] sm:$0xff]
    %v136 = vld [vmem:[#allocation8 + $0xc8] sm:$0xff]
    %v137 = vld [vmem:[#allocation8 + $0xd0] sm:$0xff]
    %v138 = vld [vmem:[#allocation8 + $0xd8] sm:$0xff]
    %v139 = vld [vmem:[#allocation8 + $0xe0] sm:$0xff]
    %v140 = vld [vmem:[#allocation8 + $0xe8] sm:$0xff]
    %v141 = vld [vmem:[#allocation8 + $0xf0] sm:$0xff]
    %v142 = vld [vmem:[#allocation8 + $0xf8] sm:$0xff]
    %v144 = vperm.slane %v76, 0
    %v145 = vperm.slane %v76, 1
    %148 = vmatpush.msra.mxu0 %v141
    %149 = vmatpush.msra.mxu0 %v139
    %150 = vmatpush.msra.mxu0 %v137
    %151 = vmatpush.msra.mxu0 %v135
    %152 = vmatpush.msra.mxu0 %v133
    %153 = vmatpush.msra.mxu0 %v131
    %154 = vmatpush.msra.mxu0 %v129
    %155 = vmatpush.msra.mxu0 %v127
    %156 = vmatpush.msra.mxu0 %v125
    %157 = vmatpush.msra.mxu0 %v123
    %158 = vmatpush.msra.mxu0 %v121
    %159 = vmatpush.msra.mxu0 %v119
    %160 = vmatpush.msra.mxu0 %v117
    %161 = vmatpush.msra.mxu0 %v115
    %162 = vmatpush.msra.mxu0 %v113
    %163 = vmatpush.msra.mxu0 %v111
    %164 = vmatmul.f32.gmra.mxu0 %v110
    %v165 = vpop.f32.mrf.mxu0
    %v166 = vadd.f32 %v144, %v165
    %167 = vdwg.mxu0
    %168 = vmatpush.msra.mxu0 %v142
    %169 = vmatpush.msra.mxu0 %v140
    %170 = vmatpush.msra.mxu0 %v138
    %171 = vmatpush.msra.mxu0 %v136
    %172 = vmatpush.msra.mxu0 %v134
    %173 = vmatpush.msra.mxu0 %v132
    %174 = vmatpush.msra.mxu0 %v130
    %175 = vmatpush.msra.mxu0 %v128
    %176 = vmatpush.msra.mxu0 %v126
    %177 = vmatpush.msra.mxu0 %v124
    %178 = vmatpush.msra.mxu0 %v122
    %179 = vmatpush.msra.mxu0 %v120
    %180 = vmatpush.msra.mxu0 %v118
    %181 = vmatpush.msra.mxu0 %v116
    %182 = vmatpush.msra.mxu0 %v114
    %183 = vmatpush.msra.mxu0 %v112
    %184 = vmatmul.f32.gmra.mxu0 %v110
    %v185 = vpop.f32.mrf.mxu0
    %v186 = vadd.f32 %v145, %v185
    %187 = vdwg.mxu0
    %v188 = vlaneseq
    %v189 = vand.u32 %v188, 127
    %v190 = vadd.s32 %v189, 128
    %vm191 = vcmp.ge.s32.totalorder %v189, 128
    %vm192 = vcmp.ge.s32.totalorder %v190, 128
    %vm193 = vcmp.lt.s32.totalorder %v189, 131
    %vm194 = vcmp.lt.s32.totalorder %v190, 131
    %vm195 = vmand %vm191, %vm193
    %vm196 = vmand %vm192, %vm194
    %v197 = vsel %vm195, %v166, -1e+30
    %v198 = vsel %vm196, %v186, -1e+30
    %vm199 = vcmask 1041408
    %v200 = vsel %vm199, %v197, -inf
    %v201 = vsel %vm199, %v198, -inf
    %v202 = vmax.f32 %v200, %v201
    %203 = vmax.xlane.f32.xlu0 %v202
    %v204 = vpop.xlane.xlu0 %203
    %v205 = vsub.f32 %v197, %v204
    %v206 = vsub.f32 %v198, %v204
    %v207 = vmul.f32 %v205, 1.442695
    %v208 = vpow.pop %v207
    %v209 = vmul.f32 %v206, 1.442695
    %v210 = vpow.pop %v209
    %v211 = vsel %vm195, %v208, 0.0
    %v212 = vsel %vm196, %v210, 0.0
    %v213 = vsel %vm199, %v211, 0.0
    %v214 = vsel %vm199, %v212, 0.0
    %v215 = vadd.f32 %v213, %v214
    %216 = vadd.xlane.f32.xlu0 %v215
    %v217 = vpop.xlane.xlu0 %216
    %v218 = vrcp.pop %v217
    %v219 = vmul.f32 %v217, %v218
    %v220 = vsub.f32 1.0, %v219
    %v221 = vmul.f32 %v218, %v220
    %v222 = vadd.f32 %v218, %v221
    %vm223 = vweird.f32 %v217
    %vm224 = vweird.f32 %v218
    %vm225 = vmor %vm223, %vm224
    %v226 = vsel %vm225, %v218, %v222
    %v227 = vand.u32 2147483647, %v217
    %vm228 = vcmp.eq.f32.partialorder %v227, 8.507059e+37
    %v229 = vand.u32 %v217, 2147483648
    %v230 = vor.u32 1.1754944e-38, %v229
    %v231 = vsel %vm228, %v230, %v226
    %v232 = vmul.f32 %v211, %v231
    %v233 = vmul.f32 %v212, %v231
    %v234 = vsel %vm195, %v232, %v166
    %v235 = vsel %vm196, %v233, %v186
    %v238 = vrot.slane %v235, 6
    %v239 = vsel %vm199, %v234, %v238
    %241 = vst [vmem:[#allocation9] sm:$0xf] %v239
    %v242 = vlaneseq
    %v243 = vshrl.u32 %v242, 7
    %s244 = smul.u32 0, 2
    %v245 = vstv %s244
    %v246 = vadd.s32 %v243, %v245
    %vm247 = vcmp.lt.s32.totalorder %v246, 2
    %249 = vrot.lane.b32.xlu0 %v166, 122
    %v250 = vpop.permute.xlu0 %249
    %v252 = vsub.f32 %v166, %v250
    %v253 = vmul.f32 %v252, %v252
    %v254 = vsel %vm247, 1, 0
    %vm255 = vcmp.eq.s32.totalorder %v254, 1
    %v256 = vsel %vm255, %v253, 0.0
    %vm257 = vcmask 41984
    %v258 = vsel %vm257, %v256, 0.0
    %259 = vadd.xlane.f32.xlu0 %v258
    %v260 = vpop.xlane.xlu0 %259
    %v261 = vrot.slane %v260, 4
    %v262 = vadd.f32 %v260, %v261
    %v263 = vrot.slane %v262, 2
    %v264 = vadd.f32 %v262, %v263
    %v265 = vrot.slane %v264, 1
    %v266 = vadd.f32 %v264, %v265
    %s267 = vtos %v266
    %268 = vrot.lane.b32.xlu0 %v166, 104
    %v269 = vpop.permute.xlu0 %268
    %v271 = vsub.f32 %v166, %v269
    %v272 = vmul.f32 %v271, %v271
    %v273 = vsel %vm255, %v272, 0.0
    %275 = vrot.lane.b32.xlu0 %v273, 122
    %v276 = vpop.permute.xlu0 %275
    %vm278 = vcmask 189440
    %v279 = vsel %vm278, %v276, 0.0
    %280 = vadd.xlane.f32.xlu0 %v279
    %v281 = vpop.xlane.xlu0 %280
    %v282 = vrot.slane %v281, 4
    %v283 = vadd.f32 %v281, %v282
    %v284 = vrot.slane %v283, 2
    %v285 = vadd.f32 %v283, %v284
    %v286 = vrot.slane %v285, 1
    %v287 = vadd.f32 %v285, %v286
    %s288 = vtos %v287
    %v289 = vrcp.pop 12.0
    %v290 = vmul.f32 12.0, %v289
    %v291 = vsub.f32 1.0, %v290
    %v292 = vmul.f32 %v289, %v291
    %v293 = vadd.f32 %v289, %v292
    %vm294 = vweird.f32 %v289
    %v295 = vsel %vm294, %v289, %v293
    %s296 = vtos %v295
    %s297 = smul.f32 %s267, %s296
    %v298 = vrcp.pop 48.0
    %v299 = vmul.f32 48.0, %v298
    %v300 = vsub.f32 1.0, %v299
    %v301 = vmul.f32 %v298, %v300
    %v302 = vadd.f32 %v298, %v301
    %vm303 = vweird.f32 %v298
    %v304 = vsel %vm303, %v298, %v302
    %s305 = vtos %v304
    %s306 = smul.f32 %s288, %s305
    %s307 = sadd.f32 %s297, %s306
    %s308 = sld [smem:[#allocation2]]
    %s309 = smul.f32 %s307, %s308
    %vm310 = vcmp.eq.s32.totalorder %v243, 0
    %vm311 = vcmp.eq.s32.totalorder %v189, 0
    %vm312 = vmand %vm310, %vm311
    %v313 = vstv %s309
    %v314 = vsel %vm312, %v313, 0.0
    %315 = vst [vmem:[#allocation10] sm:$0xff] %v314
    // Predicated region
    $region34: #{tpu_custom_call.1} parent=1 // pred_check
      _
    $region35: #{tpu_custom_call.1} parent=1 // pred_check_branch
      %317 = sbr.rel (0) target = $region37
    $region36: #{tpu_custom_call.1} parent=1 // pred_region
      %319 = vsyncadd [#allocation5], 0
      %s321 = sshll.u32 [#allocation9], 4
      %s322 = int_to_ptr.vmem [resolvable:$true] %s321
      %s323 = sshll.u32 %s5, 4
      %s324 = int_to_ptr.hbm [resolvable:$true] %s323
      %326 = dma.vmem_to_hbm [thread:$0]  %s322, 64, %s324, [#allocation5]
    $region37: #{tpu_custom_call.1} parent=1 // pred_fallthru
      _
    // Predicated region
    $region38: #{tpu_custom_call.1} parent=1 // pred_check
      _
    $region39: #{tpu_custom_call.1} parent=1 // pred_check_branch
      %328 = sbr.rel (0) target = $region41
    $region40: #{tpu_custom_call.1} parent=1 // pred_region
      %330 = vsyncadd [#allocation11], 0
      %s332 = sshll.u32 [#allocation10], 4
      %s333 = int_to_ptr.vmem [resolvable:$true] %s332
      %s334 = sshll.u32 %s6, 4
      %s335 = int_to_ptr.hbm [resolvable:$true] %s334
      %337 = dma.vmem_to_hbm [thread:$0]  %s333, 128, %s335, [#allocation11]
    $region41: #{tpu_custom_call.1} parent=1 // pred_fallthru
      _
    // Predicated region
    $region42: #{tpu_custom_call.1} parent=1 // pred_check
      _
    $region43: #{tpu_custom_call.1} parent=1 // pred_check_branch
      %339 = sbr.rel (0) target = $region45
    $region44: #{tpu_custom_call.1} parent=1 // pred_region
      %341 = dma.done [#allocation5], 64
    $region45: #{tpu_custom_call.1} parent=1 // pred_fallthru
      _
    // Predicated region
    $region46: #{tpu_custom_call.1} parent=1 // pred_check
      _
    $region47: #{tpu_custom_call.1} parent=1 // pred_check_branch
      %343 = sbr.rel (0) target = $region49
    $region48: #{tpu_custom_call.1} parent=1 // pred_region
      %345 = dma.done [#allocation11], 128
    $region49: #{tpu_custom_call.1} parent=1 // pred_fallthru
      _
    %346 = vsyncpa [#allocation4], 1
    %347 = vsyncpa [#allocation7], 1
    %348 = vsyncpa [#allocation5], 1
    %349 = vsyncpa [#allocation11], 1

</llo_original>
